<compile_context>
chip_gen: v7x
topology: tpu7x:2x2x1
jax: 0.10.0
libtpu: 0.0.40
codegen_flags: <defaults>
</compile_context>

<pallas_src>
import functools

import numpy as np

import jax
import jax.numpy as jnp
from jax.experimental import pallas as pl
from jax.experimental.pallas import tpu as pltpu

C1 = 16              # number of DFL bins (nn.Conv2d(c1, 1, 1) with c1=16)
LANE = 128           # TPU lane width
MAX_TILE_LANES = 8192  # cap: 64 * 8192 * 4 B = 2 MiB/block, 4 MiB double-buffered


def _reduction_matrix(compute_dtype):
    """(8, 4*C1): rows 0..3 -> per-side arange(C1), rows 4..7 -> per-side ones."""
    eye4 = np.eye(4, dtype=np.float32)
    top = np.kron(eye4, np.arange(C1, dtype=np.float32)[None, :])  # numerators
    bot = np.kron(eye4, np.ones((1, C1), dtype=np.float32))        # denominators
    return jnp.asarray(np.concatenate([top, bot], axis=0), dtype=compute_dtype)


def _anchor_tile(a, b, block_a=None):
    """Lane-aligned anchor tile: fewest big tiles; >=2 tiles when b==1 (v7x)."""
    a_lane = pl.cdiv(a, LANE) * LANE
    if block_a is not None:
        return min(max(LANE, (block_a // LANE) * LANE), a_lane)
    n_tiles = pl.cdiv(a_lane, MAX_TILE_LANES)
    if b == 1 and n_tiles == 1 and a_lane > LANE:
        n_tiles = 2  # give both v7x TensorCores an anchor tile
    return pl.cdiv(pl.cdiv(a_lane, n_tiles), LANE) * LANE


def dfl_kernel(w_ref, x_ref, o_ref, *, compute_dtype, exact_div):
    # w_ref: (8, 4*C1) constant reduction matrix (same block every step)
    # x_ref: (4*C1, ta)   -- batch dim squeezed out by the BlockSpec
    # o_ref: (4, ta)
    ta = x_ref.shape[-1]
    x = x_ref[...].astype(compute_dtype)                       # (64, ta)

    # Per-side max for numerical stability (do NOT use a global 64-row max:
    # a large logit gap between sides would underflow a whole side's exp).
    # The (64,ta)<->(4,16,ta) reshapes only split/merge sublane groups of 16
    # (a multiple of the 8-sublane tile), so no relayout copies are needed.
    xg = x.reshape(4, C1, ta)                                   # (4, 16, ta)
    m = jnp.max(xg, axis=1, keepdims=True)                      # (4, 1, ta)
    e = jnp.exp(xg - m).reshape(4 * C1, ta)                     # (64, ta)

    # One MXU matmul -> all 4 numerators and all 4 denominators at once.
    r = jnp.dot(w_ref[...], e, preferred_element_type=jnp.float32)  # (8, ta) f32
    num = r[0:4, :]                                             # sum(p_bin * bin)
    den = r[4:8, :]                                             # sum(p_bin)
    if exact_div:
        o_ref[...] = (num / den).astype(o_ref.dtype)
    else:
        o_ref[...] = (num * pl.reciprocal(den, approx=True)).astype(o_ref.dtype)


def dfl_forward(x, *, block_a=None, compute_dtype=jnp.float32, exact_div=False):
    """x: (b, 4*C1, a) -> (b, 4, a). Matches DFL.forward with frozen arange weight."""
    b, c, a = x.shape
    assert c == 4 * C1, f"expected {4 * C1} channels, got {c}"

    ta = _anchor_tile(a, b, block_a)
    w8 = _reduction_matrix(compute_dtype)

    kernel = functools.partial(
        dfl_kernel, compute_dtype=compute_dtype, exact_div=exact_div)

    # No input padding / output slicing: partial last block is handled by
    # Pallas (masked output store); garbage columns never reach HBM.
    return pl.pallas_call(
        kernel,
        out_shape=jax.ShapeDtypeStruct((b, 4, a), x.dtype),
        grid=(b, pl.cdiv(a, ta)),
        in_specs=[
            pl.BlockSpec((8, 4 * C1), lambda i, j: (0, 0)),       # constant, 2 KB
            pl.BlockSpec((None, c, ta), lambda i, j: (i, 0, j)),  # (64, ta) tile
        ],
        out_specs=pl.BlockSpec((None, 4, ta), lambda i, j: (i, 0, j)),
        compiler_params=pltpu.CompilerParams(
            dimension_semantics=("parallel", "parallel")),
    )(w8, x)


def dfl_reference(x):
    b, c, a = x.shape
    xr = x.reshape(b, 4, C1, a).transpose(0, 2, 1, 3)   # (b, C1, 4, a)
    p = jax.nn.softmax(xr, axis=1)
    w = jnp.arange(C1, dtype=jnp.float32)
    return jnp.einsum("bija,i->bja", p, w)              # (b, 4, a)


if __name__ == "__main__":
    # Small shapes consistent with the module; `a` deliberately NOT a multiple
    # of 128 so the partial-block (masked store) path is exercised.
    key = jax.random.PRNGKey(0)

    # Case 1: b=2, single full-row tile per batch, partial block (a=333).
    b, a = 2, 333
    x = jax.random.normal(key, (b, 4 * C1, a), dtype=jnp.float32)
    out = jax.block_until_ready(dfl_forward(x))
    ref = dfl_reference(x)
    assert out.shape == (b, 4, a)
    err = float(jnp.max(jnp.abs(out - ref)))
    assert jnp.allclose(out, ref, atol=1e-2, rtol=1e-2), err

    # Case 2: b=1 with a small forced tile -> multi-tile grid (1, 3) plus a
    # partial last block; also mimics the v7x two-TensorCore split.
    x1 = jax.random.normal(jax.random.PRNGKey(1), (1, 4 * C1, 300),
                           dtype=jnp.float32)
    out1 = jax.block_until_ready(dfl_forward(x1, block_a=128))
    ref1 = dfl_reference(x1)
    err1 = float(jnp.max(jnp.abs(out1 - ref1)))
    assert jnp.allclose(out1, ref1, atol=1e-2, rtol=1e-2), err1

    print("KERNEL_OK")
</pallas_src>

<mosaic_0001>
module attributes {stable_mosaic.version = 11 : i64} {
  func.func @dfl_kernel(%arg0: i32, %arg1: i32, %arg2: memref<8x64xf32, #tpu.memory_space<vmem>>, %arg3: memref<1x64x384xf32, #tpu.memory_space<vmem>>, %arg4: memref<1x4x384xf32, #tpu.memory_space<vmem>>) attributes {dimension_semantics = [#tpu.dimension_semantics<parallel>, #tpu.dimension_semantics<parallel>], iteration_bounds = array<i64: 2, 1>, scalar_prefetch = 0 : i64, scratch_operands = 0 : i64, tpu.core_type = #tpu.core_type<tc>, window_params = [{pipeline_mode = #tpu.pipeline_mode<synchronous>, transform_indices = @transform_0, window_bounds = array<i64: 8, 64>}, {transform_indices = @transform_1, window_bounds = array<i64: 1, 64, 384>}, {transform_indices = @transform_2, window_bounds = array<i64: 1, 4, 384>}]} {
    %c0 = arith.constant 0 : index
    %c0_0 = arith.constant 0 : index
    %c0_1 = arith.constant 0 : index
    %0 = vector.load %arg3[%c0, %c0_0, %c0_1] : memref<1x64x384xf32, #tpu.memory_space<vmem>>, vector<1x64x384xf32>
    %1 = vector.shape_cast %0 : vector<1x64x384xf32> to vector<64x384xf32>
    %2 = vector.shape_cast %1 : vector<64x384xf32> to vector<4x16x384xf32>
    %cst = arith.constant dense<0xFF800000> : vector<4x384xf32>
    %3 = vector.multi_reduction <maximumf>, %2, %cst [1] : vector<4x16x384xf32> to vector<4x384xf32>
    %4 = vector.shape_cast %3 : vector<4x384xf32> to vector<4x1x384xf32>
    %5 = vector.broadcast %4 : vector<4x1x384xf32> to vector<4x16x384xf32>
    %6 = arith.subf %2, %5 : vector<4x16x384xf32>
    %7 = math.exp %6 : vector<4x16x384xf32>
    %8 = vector.shape_cast %7 : vector<4x16x384xf32> to vector<64x384xf32>
    %c0_2 = arith.constant 0 : index
    %c0_3 = arith.constant 0 : index
    %9 = vector.load %arg2[%c0_2, %c0_3] : memref<8x64xf32, #tpu.memory_space<vmem>>, vector<8x64xf32>
    %cst_4 = arith.constant dense<0.000000e+00> : vector<8x384xf32>
    %10 = tpu.matmul %9, %8, %cst_4 {dimension_numbers = #tpu.dot_dimension_numbers<[1], [0], [0], [1], [0, 0, 1, 1], [], []>} : vector<8x64xf32>, vector<64x384xf32>, vector<8x384xf32> -> vector<8x384xf32>
    %11 = vector.extract_strided_slice %10 {offsets = [0, 0], sizes = [4, 384], strides = [1, 1]} : vector<8x384xf32> to vector<4x384xf32>
    %12 = vector.extract_strided_slice %10 {offsets = [4, 0], sizes = [4, 384], strides = [1, 1]} : vector<8x384xf32> to vector<4x384xf32>
    %13 = tpu.reciprocal %12 {approx = true} : vector<4x384xf32> -> vector<4x384xf32>
    %14 = arith.mulf %11, %13 : vector<4x384xf32>
    %c0_5 = arith.constant 0 : index
    %c0_6 = arith.constant 0 : index
    %c0_7 = arith.constant 0 : index
    %15 = vector.load %arg4[%c0_5, %c0_6, %c0_7] : memref<1x4x384xf32, #tpu.memory_space<vmem>>, vector<1x4x384xf32>
    %16 = vector.shape_cast %15 : vector<1x4x384xf32> to vector<4x384xf32>
    %17 = vector.shape_cast %14 : vector<4x384xf32> to vector<1x4x384xf32>
    tpu.vector_store %arg4[%c0_5, %c0_6, %c0_7], %17 {strides = array<i32>} : memref<1x4x384xf32, #tpu.memory_space<vmem>>, vector<1x4x384xf32>,
    return
  }
  func.func @transform_0(%arg0: i32, %arg1: i32) -> (i32, i32) {
    %c0_i32 = arith.constant 0 : i32
    %c0_i32_0 = arith.constant 0 : i32
    %c0_i32_1 = arith.constant 0 : i32
    return %c0_i32, %c0_i32_0 : i32, i32
  }
  func.func @transform_1(%arg0: i32, %arg1: i32) -> (i32, i32, i32) {
    %c0_i32 = arith.constant 0 : i32
    %c0_i32_0 = arith.constant 0 : i32
    return %arg0, %c0_i32, %arg1 : i32, i32, i32
  }
  func.func @transform_2(%arg0: i32, %arg1: i32) -> (i32, i32, i32) {
    %c0_i32 = arith.constant 0 : i32
    %c0_i32_0 = arith.constant 0 : i32
    return %arg0, %c0_i32, %arg1 : i32, i32, i32
  }
}

</mosaic_0001>

<llo_original>
// kernel: tpu_custom_call.1
$region0: #{tpu_custom_call.1}
  #allocation0 [shape = 'u32[]', space=smem, size = 0x4, offset = 0x4, fixed_abs, tag = 'smem constant byte address 0x4 - core index']
  #allocation1 [shape = 'u32[144,128]{1,0:T(1,128)}', space=vmem, size = 0x12000, scoped, tag = 'internal scratch']
  %s0 = inlined_call_operand.hbm [shape: f32[8,64], index: 0, kind: input, shape index: {}]
  %s1 = inlined_call_operand.hbm [shape: f32[2,64,333], index: 1, kind: input, shape index: {}]
  %s2 = inlined_call_operand.hbm [shape: f32[2,4,333], index: 2, kind: output, shape index: {}]
  %s3 = sld [smem:[#allocation0]]
  $region49: #{tpu_custom_call.1} parent=0
    _
  %s5 = ssub.s32 1, %s3
  %s6 = scalar_select 0, %s5, %s3
  $region1: #{tpu_custom_call.1} parent=0
    #allocation2 [shape = 'u8[4096]{0}', space=vmem, size = 0x1000, scoped, tag = 'input window, operand 0, single buffered']
    #allocation3 [shape = 's32[2]{0}', space=sflag, size = 0x8, scoped, tag = 'scoped memory for tpu_custom_call.1']
    #allocation4 [shape = 's32[2]{0}', space=sflag, size = 0x8, scoped, tag = 'scoped memory for tpu_custom_call.1']
    #allocation5 [shape = 'u8[196608]{0}', space=vmem, size = 0x30000, scoped, tag = 'input window, operand 1']
    #allocation6 [shape = 's32[2]{0}', space=sflag, size = 0x8, scoped, tag = 'scoped memory for tpu_custom_call.1']
    #allocation7 [shape = 'u8[12288]{0}', space=vmem, size = 0x3000, scoped, tag = 'output window, operand 0']
    %7 = vsyncpa [#allocation3], 0
    %8 = vsyncpa [#allocation6], 0
    %s9 = scalar_lea.sflag [#allocation6], 1
    %10 = vsyncpa %s9, 0
    %11 = vsyncpa [#allocation4], 0
    %s12 = scalar_lea.sflag [#allocation4], 1
    %13 = vsyncpa %s12, 0
    loop: start=0, step=1, limit=4
    $region2: #{tpu_custom_call.1} parent=1 // loop_pre_header
      _
    $region3: #{tpu_custom_call.1} parent=1 // loop_header
      %s15 = sphi 0, %s19
      %p16 = scmp.ge.s32.totalorder %s15, 4
      %s22 = sphi 0, %s34
      %s23 = sphi 0, %s30
      %s24 = sphi 0, %s22
      %s25 = sphi 0, %s23
      %s26 = sphi 0, %s24
      %s27 = sphi 0, %s25
      %s35 = sphi 0, %s35
      %s37 = sphi 0, %s35
      %s38 = sphi 0, %s37
      %s52 = sphi 0, %s38
      %s60 = sphi 0, %s62
      %s63 = sphi 0, %s60
      %s64 = sphi 0, %s63
      %s80 = sphi 0, %s64
      %s88 = sphi 0, %s90
      %s91 = sphi 0, %s88
      %s92 = sphi 0, %s91
      %s108 = sphi 0, %s92
    $region4: #{tpu_custom_call.1} parent=1 // loop_header_branch
      %18 = sbr.rel (%p16) target = $region8
    $region5: #{tpu_custom_call.1} parent=1 // loop_body
      %s20 = ssub.s32 %s15, 1
      %s21 = ssub.s32 %s15, 2
      %s28 = sadd.s32 1, %s23
      %p29 = scmp.ge.s32.totalorder %s28, 1
      %s30 = scalar_select %p29, 0, %s28
      %s31 = sadd.s32 1, %s22
      %s32 = scalar_select %p29, %s31, %s22
      %p33 = scmp.ge.s32.totalorder %s32, 2
      %s34 = scalar_select %p33, 0, %s32
      %s36 = sadd.s32 %s35, 1
      %p39 = scmp.eq.s32.totalorder %s15, 1
      %p40 = scmp.ne.s32.totalorder %s35, %s37
      %p41 = scmp.eq.s32.totalorder %s15, 0
      %p42 = por %p40, %p41
      %p43 = scmp.ne.s32.totalorder %s35, %s37
      %p44 = scmp.eq.s32.totalorder %s20, 1
      %p45 = por %p43, %p44
      %p46 = scmp.ne.s32.totalorder %s37, %s38
      %p47 = scmp.eq.s32.totalorder %s20, 0
      %p48 = por %p46, %p47
      %p49 = scmp.ne.s32.totalorder %s37, %s38
      %p50 = scmp.eq.s32.totalorder %s21, 1
      %p51 = por %p49, %p50
      %p53 = scmp.ne.s32.totalorder %s38, %s52
      %p54 = scmp.eq.s32.totalorder %s21, 0
      %p55 = por %p53, %p54
      %s56 = ssub.s32 %s22, %s34
      %s57 = ssub.s32 %s23, %s30
      %s58 = sor.u32 %s56, %s57
      %p59 = scmp.eq.s32.totalorder %s58, 0
      %s61 = sadd.s32 %s60, 1
      %s62 = scalar_select %p59, %s60, %s61
      %p65 = pneg %p59
      %p66 = scmp.eq.s32.totalorder %s15, 1
      %p67 = por %p65, %p66
      %p68 = scmp.ne.s32.totalorder %s60, %s63
      %p69 = scmp.eq.s32.totalorder %s15, 0
      %p70 = por %p68, %p69
      %p71 = scmp.ne.s32.totalorder %s60, %s63
      %p72 = scmp.eq.s32.totalorder %s20, 1
      %p73 = por %p71, %p72
      %p74 = scmp.ne.s32.totalorder %s63, %s64
      %p75 = scmp.eq.s32.totalorder %s20, 0
      %p76 = por %p74, %p75
      %p77 = scmp.ne.s32.totalorder %s63, %s64
      %p78 = scmp.eq.s32.totalorder %s21, 1
      %p79 = por %p77, %p78
      %p81 = scmp.ne.s32.totalorder %s64, %s80
      %p82 = scmp.eq.s32.totalorder %s21, 0
      %p83 = por %p81, %p82
      %s84 = ssub.s32 %s22, %s34
      %s85 = ssub.s32 %s23, %s30
      %s86 = sor.u32 %s84, %s85
      %p87 = scmp.eq.s32.totalorder %s86, 0
      %s89 = sadd.s32 %s88, 1
      %s90 = scalar_select %p87, %s88, %s89
      %p93 = pneg %p87
      %p94 = scmp.eq.s32.totalorder %s15, 1
      %p95 = por %p93, %p94
      %p96 = scmp.ne.s32.totalorder %s88, %s91
      %p97 = scmp.eq.s32.totalorder %s15, 0
      %p98 = por %p96, %p97
      %p99 = scmp.ne.s32.totalorder %s88, %s91
      %p100 = scmp.eq.s32.totalorder %s20, 1
      %p101 = por %p99, %p100
      %p102 = scmp.ne.s32.totalorder %s91, %s92
      %p103 = scmp.eq.s32.totalorder %s20, 0
      %p104 = por %p102, %p103
      %p105 = scmp.ne.s32.totalorder %s91, %s92
      %p106 = scmp.eq.s32.totalorder %s21, 1
      %p107 = por %p105, %p106
      %p109 = scmp.ne.s32.totalorder %s92, %s108
      %p110 = scmp.eq.s32.totalorder %s21, 0
      %p111 = por %p109, %p110
      %p112 = scmp.le.s32.totalorder 1, %s15
      %p113 = scmp.lt.s32.totalorder %s15, 3
      %p114 = pnand %p112, %p113
      %p115 = pneg %p114
      // Predicated region
      $region9: #{tpu_custom_call.1} parent=5 // pred_check
        _
      $region10: #{tpu_custom_call.1} parent=5 // pred_check_branch
        %117 = sbr.rel (%p114) target = $region12
      $region11: #{tpu_custom_call.1} parent=5 // pred_region
        %s118 = ssub.s32 %s15, 1
        // Predicated region
        $region13: #{tpu_custom_call.1} parent=11 // pred_check
          %p119 = pneg %p48
        $region14: #{tpu_custom_call.1} parent=11 // pred_check_branch
          %121 = sbr.rel (%p119) target = $region16
        $region15: #{tpu_custom_call.1} parent=11 // pred_region
          %s123 = ssub.s32 128, 128
          %124 = vsyncadd [#allocation3], %s123
          %s126 = sshll.u32 [#allocation2], 4
          %s127 = int_to_ptr.vmem [resolvable:$true] %s126
          %129 = dma.hbm_to_vmem [thread:$0]  %s0, 128, %s127, [#allocation3]
        $region16: #{tpu_custom_call.1} parent=11 // pred_fallthru
          _
      $region12: #{tpu_custom_call.1} parent=5 // pred_fallthru
        _
      %p130 = scmp.lt.s32.totalorder %s15, 2
      // Predicated region
      $region17: #{tpu_custom_call.1} parent=5 // pred_check
        %p131 = pneg %p130
      $region18: #{tpu_custom_call.1} parent=5 // pred_check_branch
        %133 = sbr.rel (%p131) target = $region20
      $region19: #{tpu_custom_call.1} parent=5 // pred_region
        // Predicated region
        $region21: #{tpu_custom_call.1} parent=19 // pred_check
          %p134 = pneg %p70
        $region22: #{tpu_custom_call.1} parent=19 // pred_check_branch
          %136 = sbr.rel (%p134) target = $region24
        $region23: #{tpu_custom_call.1} parent=19 // pred_region
          %s137 = sand.u32 %s60, 1
          %s138 = scalar_lea.sflag [#allocation6], %s137
          %s139 = sand.u32 %s60, 1
          %s140 = smul.addr %s139, 192
          %s141 = scalar_lea.vmem [#allocation5], %s140
          %s142 = smul.u32 3, %s23
          %s144 = ssub.s32 3072, 3072
          %145 = vsyncadd %s138, %s144
          %s146 = smul.addr %s22, 24
          %s147 = sadd.s32 %s142, %s146
          %s148 = smul.addr %s147, 128
          %s149 = scalar_lea.hbm %s1, %s148
          %s150 = sshll.u32 %s141, 4
          %s151 = int_to_ptr.vmem [resolvable:$true] %s150
          %156 = dma.hbm_to_vmem [thread:$0]  %s149, 3072, %s151, %s138, 384, 384, 24
        $region24: #{tpu_custom_call.1} parent=19 // pred_fallthru
          _
      $region20: #{tpu_custom_call.1} parent=5 // pred_fallthru
        _
      %p157 = scmp.le.s32.totalorder 1, %s15
      %p158 = scmp.lt.s32.totalorder %s15, 3
      %p159 = pnand %p157, %p158
      %p160 = pneg %p159
      // Predicated region
      $region25: #{tpu_custom_call.1} parent=5 // pred_check
        _
      $region26: #{tpu_custom_call.1} parent=5 // pred_check_branch
        %162 = sbr.rel (%p159) target = $region28
      $region27: #{tpu_custom_call.1} parent=5 // pred_region
        %s163 = ssub.s32 %s15, 1
        // Predicated region
        $region29: #{tpu_custom_call.1} parent=27 // pred_check
          %p164 = pneg %p48
        $region30: #{tpu_custom_call.1} parent=27 // pred_check_branch
          %166 = sbr.rel (%p164) target = $region32
        $region31: #{tpu_custom_call.1} parent=27 // pred_region
          %167 = dma.done [#allocation3], 128
        $region32: #{tpu_custom_call.1} parent=27 // pred_fallthru
          _
        %s168 = sand.u32 %s63, 1
        %s169 = scalar_lea.sflag [#allocation6], %s168
        %s170 = sand.u32 %s63, 1
        %s171 = smul.addr %s170, 192
        %s172 = scalar_lea.vmem [#allocation5], %s171
        // Predicated region
        $region33: #{tpu_custom_call.1} parent=27 // pred_check
          %p173 = pneg %p76
        $region34: #{tpu_custom_call.1} parent=27 // pred_check_branch
          %175 = sbr.rel (%p173) target = $region36
        $region35: #{tpu_custom_call.1} parent=27 // pred_region
          %176 = dma.done %s169, 3072
        $region36: #{tpu_custom_call.1} parent=27 // pred_fallthru
          _
        %p177 = pneg %p48
        %p178 = pneg %p45
        %s179 = sand.u32 %s63, 1
        %s180 = scalar_lea.sflag [#allocation6], %s179
        %s181 = sand.u32 %s63, 1
        %s182 = smul.addr %s181, 192
        %s183 = scalar_lea.vmem [#allocation5], %s182
        %p184 = pneg %p76
        %p185 = pneg %p73
        %p186 = pneg %p104
        %p187 = pneg %p101
        %s188 = sand.u32 %s91, 1
        %s189 = scalar_lea.sflag [#allocation4], %s188
        %s190 = sand.u32 %s91, 1
        %s191 = smul.addr %s190, 12
        %s192 = scalar_lea.vmem [#allocation7], %s191
        %s193 = smul.u32 3, %s25
        %s194 = smul.u32 3, %s25
        %v195 = vld [vmem:[%s172] sm:$0xff]
        %v196 = vld [vmem:[%s172 + $0x8] sm:$0xff]
        %v197 = vld [vmem:[%s172 + $0x10] sm:$0xff]
        %v198 = vld [vmem:[%s172 + $0x18] sm:$0xff]
        %v199 = vld [vmem:[%s172 + $0x20] sm:$0xff]
        %v200 = vld [vmem:[%s172 + $0x28] sm:$0xff]
        %v201 = vld [vmem:[%s172 + $0x30] sm:$0xff]
        %v202 = vld [vmem:[%s172 + $0x38] sm:$0xff]
        %v203 = vld [vmem:[%s172 + $0x40] sm:$0xff]
        %v204 = vld [vmem:[%s172 + $0x48] sm:$0xff]
        %v205 = vld [vmem:[%s172 + $0x50] sm:$0xff]
        %v206 = vld [vmem:[%s172 + $0x58] sm:$0xff]
        %v207 = vld [vmem:[%s172 + $0x60] sm:$0xff]
        %v208 = vld [vmem:[%s172 + $0x68] sm:$0xff]
        %v209 = vld [vmem:[%s172 + $0x70] sm:$0xff]
        %v210 = vld [vmem:[%s172 + $0x78] sm:$0xff]
        %v211 = vld [vmem:[%s172 + $0x80] sm:$0xff]
        %v212 = vld [vmem:[%s172 + $0x88] sm:$0xff]
        %v213 = vld [vmem:[%s172 + $0x90] sm:$0xff]
        %v214 = vld [vmem:[%s172 + $0x98] sm:$0xff]
        %v215 = vld [vmem:[%s172 + $0xa0] sm:$0xff]
        %v216 = vld [vmem:[%s172 + $0xa8] sm:$0xff]
        %v217 = vld [vmem:[%s172 + $0xb0] sm:$0xff]
        %v218 = vld [vmem:[%s172 + $0xb8] sm:$0xff]
        %v219 = vmax.f32 %v195, %v198
        %v220 = vrot.slane %v219, 4
        %v221 = vmax.f32 %v219, %v220
        %v222 = vrot.slane %v221, 2
        %v223 = vmax.f32 %v221, %v222
        %v224 = vrot.slane %v223, 1
        %v225 = vmax.f32 %v223, %v224
        %v226 = vmax.f32 %v196, %v199
        %v227 = vrot.slane %v226, 4
        %v228 = vmax.f32 %v226, %v227
        %v229 = vrot.slane %v228, 2
        %v230 = vmax.f32 %v228, %v229
        %v231 = vrot.slane %v230, 1
        %v232 = vmax.f32 %v230, %v231
        %v233 = vmax.f32 %v197, %v200
        %v234 = vrot.slane %v233, 4
        %v235 = vmax.f32 %v233, %v234
        %v236 = vrot.slane %v235, 2
        %v237 = vmax.f32 %v235, %v236
        %v238 = vrot.slane %v237, 1
        %v239 = vmax.f32 %v237, %v238
        %v240 = vmax.f32 %v201, %v204
        %v241 = vrot.slane %v240, 4
        %v242 = vmax.f32 %v240, %v241
        %v243 = vrot.slane %v242, 2
        %v244 = vmax.f32 %v242, %v243
        %v245 = vrot.slane %v244, 1
        %v246 = vmax.f32 %v244, %v245
        %v247 = vmax.f32 %v202, %v205
        %v248 = vrot.slane %v247, 4
        %v249 = vmax.f32 %v247, %v248
        %v250 = vrot.slane %v249, 2
        %v251 = vmax.f32 %v249, %v250
        %v252 = vrot.slane %v251, 1
        %v253 = vmax.f32 %v251, %v252
        %v254 = vmax.f32 %v203, %v206
        %v255 = vrot.slane %v254, 4
        %v256 = vmax.f32 %v254, %v255
        %v257 = vrot.slane %v256, 2
        %v258 = vmax.f32 %v256, %v257
        %v259 = vrot.slane %v258, 1
        %v260 = vmax.f32 %v258, %v259
        %v261 = vmax.f32 %v207, %v210
        %v262 = vrot.slane %v261, 4
        %v263 = vmax.f32 %v261, %v262
        %v264 = vrot.slane %v263, 2
        %v265 = vmax.f32 %v263, %v264
        %v266 = vrot.slane %v265, 1
        %v267 = vmax.f32 %v265, %v266
        %v268 = vmax.f32 %v208, %v211
        %v269 = vrot.slane %v268, 4
        %v270 = vmax.f32 %v268, %v269
        %v271 = vrot.slane %v270, 2
        %v272 = vmax.f32 %v270, %v271
        %v273 = vrot.slane %v272, 1
        %v274 = vmax.f32 %v272, %v273
        %v275 = vmax.f32 %v209, %v212
        %v276 = vrot.slane %v275, 4
        %v277 = vmax.f32 %v275, %v276
        %v278 = vrot.slane %v277, 2
        %v279 = vmax.f32 %v277, %v278
        %v280 = vrot.slane %v279, 1
        %v281 = vmax.f32 %v279, %v280
        %v282 = vmax.f32 %v213, %v216
        %v283 = vrot.slane %v282, 4
        %v284 = vmax.f32 %v282, %v283
        %v285 = vrot.slane %v284, 2
        %v286 = vmax.f32 %v284, %v285
        %v287 = vrot.slane %v286, 1
        %v288 = vmax.f32 %v286, %v287
        %v289 = vmax.f32 %v214, %v217
        %v290 = vrot.slane %v289, 4
        %v291 = vmax.f32 %v289, %v290
        %v292 = vrot.slane %v291, 2
        %v293 = vmax.f32 %v291, %v292
        %v294 = vrot.slane %v293, 1
        %v295 = vmax.f32 %v293, %v294
        %v296 = vmax.f32 %v215, %v218
        %v297 = vrot.slane %v296, 4
        %v298 = vmax.f32 %v296, %v297
        %v299 = vrot.slane %v298, 2
        %v300 = vmax.f32 %v298, %v299
        %v301 = vrot.slane %v300, 1
        %v302 = vmax.f32 %v300, %v301
        %v303 = vsub.f32 %v195, %v225
        %v304 = vsub.f32 %v196, %v232
        %v305 = vsub.f32 %v197, %v239
        %v306 = vsub.f32 %v198, %v225
        %v307 = vsub.f32 %v199, %v232
        %v308 = vsub.f32 %v200, %v239
        %v309 = vsub.f32 %v201, %v246
        %v310 = vsub.f32 %v202, %v253
        %v311 = vsub.f32 %v203, %v260
        %v312 = vsub.f32 %v204, %v246
        %v313 = vsub.f32 %v205, %v253
        %v314 = vsub.f32 %v206, %v260
        %v315 = vsub.f32 %v207, %v267
        %v316 = vsub.f32 %v208, %v274
        %v317 = vsub.f32 %v209, %v281
        %v318 = vsub.f32 %v210, %v267
        %v319 = vsub.f32 %v211, %v274
        %v320 = vsub.f32 %v212, %v281
        %v321 = vsub.f32 %v213, %v288
        %v322 = vsub.f32 %v214, %v295
        %v323 = vsub.f32 %v215, %v302
        %v324 = vsub.f32 %v216, %v288
        %v325 = vsub.f32 %v217, %v295
        %v326 = vsub.f32 %v218, %v302
        %v327 = vmul.f32 %v303, 1.442695
        %v328 = vpow.pop %v327
        %v329 = vmul.f32 %v304, 1.442695
        %v330 = vpow.pop %v329
        %v331 = vmul.f32 %v305, 1.442695
        %v332 = vpow.pop %v331
        %v333 = vmul.f32 %v306, 1.442695
        %v334 = vpow.pop %v333
        %v335 = vmul.f32 %v307, 1.442695
        %v336 = vpow.pop %v335
        %v337 = vmul.f32 %v308, 1.442695
        %v338 = vpow.pop %v337
        %v339 = vmul.f32 %v309, 1.442695
        %v340 = vpow.pop %v339
        %v341 = vmul.f32 %v310, 1.442695
        %v342 = vpow.pop %v341
        %v343 = vmul.f32 %v311, 1.442695
        %v344 = vpow.pop %v343
        %v345 = vmul.f32 %v312, 1.442695
        %v346 = vpow.pop %v345
        %v347 = vmul.f32 %v313, 1.442695
        %v348 = vpow.pop %v347
        %v349 = vmul.f32 %v314, 1.442695
        %v350 = vpow.pop %v349
        %v351 = vmul.f32 %v315, 1.442695
        %v352 = vpow.pop %v351
        %v353 = vmul.f32 %v316, 1.442695
        %v354 = vpow.pop %v353
        %v355 = vmul.f32 %v317, 1.442695
        %v356 = vpow.pop %v355
        %v357 = vmul.f32 %v318, 1.442695
        %v358 = vpow.pop %v357
        %v359 = vmul.f32 %v319, 1.442695
        %v360 = vpow.pop %v359
        %v361 = vmul.f32 %v320, 1.442695
        %v362 = vpow.pop %v361
        %v363 = vmul.f32 %v321, 1.442695
        %v364 = vpow.pop %v363
        %v365 = vmul.f32 %v322, 1.442695
        %v366 = vpow.pop %v365
        %v367 = vmul.f32 %v323, 1.442695
        %v368 = vpow.pop %v367
        %v369 = vmul.f32 %v324, 1.442695
        %v370 = vpow.pop %v369
        %v371 = vmul.f32 %v325, 1.442695
        %v372 = vpow.pop %v371
        %v373 = vmul.f32 %v326, 1.442695
        %v374 = vpow.pop %v373
        %v375 = vld [vmem:[#allocation2] sm:$0xff]
        %vm376 = vcmask 523264
        %v378 = vsel %vm376, %v375, 0
        %380 = vmatprep.subr.mxu0 %v330
        %381 = vmatpush1.msra.mxu0 %v328
        %382 = vmatprep.subr.mxu0 %v336
        %383 = vmatpush1.msra.mxu0 %v334
        %384 = vmatprep.subr.mxu0 %v342
        %385 = vmatpush1.msra.mxu0 %v340
        %386 = vmatprep.subr.mxu0 %v348
        %387 = vmatpush1.msra.mxu0 %v346
        %388 = vmatprep.subr.mxu0 %v354
        %389 = vmatpush1.msra.mxu0 %v352
        %390 = vmatprep.subr.mxu0 %v360
        %391 = vmatpush1.msra.mxu0 %v358
        %392 = vmatprep.subr.mxu0 %v366
        %393 = vmatpush1.msra.mxu0 %v364
        %394 = vmatprep.subr.mxu0 %v372
        %395 = vmatpush1.msra.mxu0 %v370
        %396 = vmatprep.subr.mxu0 0.0
        %397 = vmatpush1.msra.mxu0 0.0
        %398 = vmatprep.subr.mxu0 0.0
        %399 = vmatpush1.msra.mxu0 0.0
        %400 = vmatprep.subr.mxu0 0.0
        %401 = vmatpush1.msra.mxu0 0.0
        %402 = vmatprep.subr.mxu0 0.0
        %403 = vmatpush1.msra.mxu0 0.0
        %404 = vmatprep.subr.mxu0 0.0
        %405 = vmatpush1.msra.mxu0 0.0
        %406 = vmatprep.subr.mxu0 0.0
        %407 = vmatpush1.msra.mxu0 0.0
        %408 = vmatprep.subr.mxu0 0.0
        %409 = vmatpush1.msra.mxu0 0.0
        %410 = vmatprep.subr.mxu0 0.0
        %411 = vmatpush1.msra.mxu0 0.0
        %412 = vmatprep.subr.mxu0 0.0
        %413 = vmatpush1.msra.mxu0 0.0
        %414 = vmatprep.subr.mxu0 0.0
        %415 = vmatpush1.msra.mxu0 0.0
        %416 = vmatprep.subr.mxu0 0.0
        %417 = vmatpush1.msra.mxu0 0.0
        %418 = vmatprep.subr.mxu0 0.0
        %419 = vmatpush1.msra.mxu0 0.0
        %420 = vmatprep.subr.mxu0 0.0
        %421 = vmatpush1.msra.mxu0 0.0
        %422 = vmatprep.subr.mxu0 0.0
        %423 = vmatpush1.msra.mxu0 0.0
        %424 = vmatprep.subr.mxu0 0.0
        %425 = vmatpush1.msra.mxu0 0.0
        %426 = vmatprep.subr.mxu0 0.0
        %427 = vmatpush1.msra.mxu0 0.0
        %428 = vmatprep.subr.mxu0 0.0
        %429 = vmatpush1.msra.mxu0 0.0
        %430 = vmatprep.subr.mxu0 0.0
        %431 = vmatpush1.msra.mxu0 0.0
        %432 = vmatprep.subr.mxu0 0.0
        %433 = vmatpush1.msra.mxu0 0.0
        %434 = vmatprep.subr.mxu0 0.0
        %435 = vmatpush1.msra.mxu0 0.0
        %436 = vmatprep.subr.mxu0 0.0
        %437 = vmatpush1.msra.mxu0 0.0
        %438 = vmatprep.subr.mxu0 0.0
        %439 = vmatpush1.msra.mxu0 0.0
        %440 = vmatprep.subr.mxu0 0.0
        %441 = vmatpush1.msra.mxu0 0.0
        %442 = vmatprep.subr.mxu0 0.0
        %443 = vmatpush1.msra.mxu0 0.0
        %444 = vmatprep.mubr.f32.mxu0 0.0
        %445 = vmatmul.mubr.f32.gmra.mrb[0].mxu0 %v378
        %v446 = vpop.f32.mrb[0].mxu0
        %v447 = vadd.f32 0.0, %v446
        %v448 = vpop.f32.mrb[0].mxu0
        %v449 = vadd.f32 0.0, %v448
        %450 = vdwg.mxu0
        %451 = vmatprep.subr.mxu0 0.0
        %452 = vmatpush1.msra.mxu0 %v332
        %453 = vmatprep.subr.mxu0 0.0
        %454 = vmatpush1.msra.mxu0 %v338
        %455 = vmatprep.subr.mxu0 0.0
        %456 = vmatpush1.msra.mxu0 %v344
        %457 = vmatprep.subr.mxu0 0.0
        %458 = vmatpush1.msra.mxu0 %v350
        %459 = vmatprep.subr.mxu0 0.0
        %460 = vmatpush1.msra.mxu0 %v356
        %461 = vmatprep.subr.mxu0 0.0
        %462 = vmatpush1.msra.mxu0 %v362
        %463 = vmatprep.subr.mxu0 0.0
        %464 = vmatpush1.msra.mxu0 %v368
        %465 = vmatprep.subr.mxu0 0.0
        %466 = vmatpush1.msra.mxu0 %v374
        %467 = vmatprep.subr.mxu0 0.0
        %468 = vmatpush1.msra.mxu0 0.0
        %469 = vmatprep.subr.mxu0 0.0
        %470 = vmatpush1.msra.mxu0 0.0
        %471 = vmatprep.subr.mxu0 0.0
        %472 = vmatpush1.msra.mxu0 0.0
        %473 = vmatprep.subr.mxu0 0.0
        %474 = vmatpush1.msra.mxu0 0.0
        %475 = vmatprep.subr.mxu0 0.0
        %476 = vmatpush1.msra.mxu0 0.0
        %477 = vmatprep.subr.mxu0 0.0
        %478 = vmatpush1.msra.mxu0 0.0
        %479 = vmatprep.subr.mxu0 0.0
        %480 = vmatpush1.msra.mxu0 0.0
        %481 = vmatprep.subr.mxu0 0.0
        %482 = vmatpush1.msra.mxu0 0.0
        %483 = vmatprep.subr.mxu0 0.0
        %484 = vmatpush1.msra.mxu0 0.0
        %485 = vmatprep.subr.mxu0 0.0
        %486 = vmatpush1.msra.mxu0 0.0
        %487 = vmatprep.subr.mxu0 0.0
        %488 = vmatpush1.msra.mxu0 0.0
        %489 = vmatprep.subr.mxu0 0.0
        %490 = vmatpush1.msra.mxu0 0.0
        %491 = vmatprep.subr.mxu0 0.0
        %492 = vmatpush1.msra.mxu0 0.0
        %493 = vmatprep.subr.mxu0 0.0
        %494 = vmatpush1.msra.mxu0 0.0
        %495 = vmatprep.subr.mxu0 0.0
        %496 = vmatpush1.msra.mxu0 0.0
        %497 = vmatprep.subr.mxu0 0.0
        %498 = vmatpush1.msra.mxu0 0.0
        %499 = vmatprep.subr.mxu0 0.0
        %500 = vmatpush1.msra.mxu0 0.0
        %501 = vmatprep.subr.mxu0 0.0
        %502 = vmatpush1.msra.mxu0 0.0
        %503 = vmatprep.subr.mxu0 0.0
        %504 = vmatpush1.msra.mxu0 0.0
        %505 = vmatprep.subr.mxu0 0.0
        %506 = vmatpush1.msra.mxu0 0.0
        %507 = vmatprep.subr.mxu0 0.0
        %508 = vmatpush1.msra.mxu0 0.0
        %509 = vmatprep.subr.mxu0 0.0
        %510 = vmatpush1.msra.mxu0 0.0
        %511 = vmatprep.subr.mxu0 0.0
        %512 = vmatpush1.msra.mxu0 0.0
        %513 = vmatprep.subr.mxu0 0.0
        %514 = vmatpush1.msra.mxu0 0.0
        %515 = vmatprep.mubr.f32.mxu0 0.0
        %516 = vmatmul.mubr.f32.gmra.mrb[0].mxu0 %v378
        %v517 = vpop.f32.mrb[0].mxu0
        %v518 = vadd.f32 0.0, %v517
        %v519 = vpop.f32.mrb[0].mxu0
        %520 = vdwg.mxu0
        %v521 = vrcp.pop %v447
        %v522 = vrcp.pop %v449
        %v523 = vrcp.pop %v518
        %v527 = vrot.slane %v521, 4
        %v528 = vrot.slane %v522, 4
        %v529 = vrot.slane %v523, 4
        %v533 = vmul.f32 %v447, %v527
        %v534 = vmul.f32 %v449, %v528
        %v535 = vmul.f32 %v518, %v529
        %v538 = vcombine.low %v533, %v534
        %540 = vst [vmem:[%s192] sm:$0xff] %v538
        %541 = vst [vmem:[%s192 + $0x8] sm:$0xf] %v535
        %s542 = sand.u32 %s91, 1
        %s543 = scalar_lea.sflag [#allocation4], %s542
        %s544 = sand.u32 %s91, 1
        %s545 = smul.addr %s544, 12
        %s546 = scalar_lea.vmem [#allocation7], %s545
        // Predicated region
        $region37: #{tpu_custom_call.1} parent=27 // pred_check
          %p547 = pneg %p101
        $region38: #{tpu_custom_call.1} parent=27 // pred_check_branch
          %549 = sbr.rel (%p547) target = $region40
        $region39: #{tpu_custom_call.1} parent=27 // pred_region
          %s550 = smul.u32 3, %s25
          %s552 = ssub.s32 192, 192
          %553 = vsyncadd %s543, %s552
          %s554 = smul.addr %s24, 3
          %s555 = sadd.s32 %s550, %s554
          %s556 = smul.addr %s555, 64
          %s557 = scalar_lea.hbm %s2, %s556
          %s559 = sshll.u32 %s546, 4
          %s560 = int_to_ptr.vmem [resolvable:$true] %s559
          %562 = dma.vmem_to_hbm [thread:$0]  %s560, 192, %s557, %s543
        $region40: #{tpu_custom_call.1} parent=27 // pred_fallthru
          _
      $region28: #{tpu_custom_call.1} parent=5 // pred_fallthru
        _
      %p563 = scmp.le.s32.totalorder 2, %s15
      // Predicated region
      $region41: #{tpu_custom_call.1} parent=5 // pred_check
        %p564 = pneg %p563
      $region42: #{tpu_custom_call.1} parent=5 // pred_check_branch
        %566 = sbr.rel (%p564) target = $region44
      $region43: #{tpu_custom_call.1} parent=5 // pred_region
        %s567 = ssub.s32 %s15, 2
        // Predicated region
        $region45: #{tpu_custom_call.1} parent=43 // pred_check
          %p568 = pneg %p107
        $region46: #{tpu_custom_call.1} parent=43 // pred_check_branch
          %570 = sbr.rel (%p568) target = $region48
        $region47: #{tpu_custom_call.1} parent=43 // pred_region
          %s571 = sand.u32 %s92, 1
          %s572 = scalar_lea.sflag [#allocation4], %s571
          %s573 = sand.u32 %s92, 1
          %s574 = smul.addr %s573, 12
          %s575 = scalar_lea.vmem [#allocation7], %s574
          %576 = dma.done %s572, 192
        $region48: #{tpu_custom_call.1} parent=43 // pred_fallthru
          _
      $region44: #{tpu_custom_call.1} parent=5 // pred_fallthru
        _
    $region6: #{tpu_custom_call.1} parent=1 // loop_footer
      %s19 = sadd.s32 1, %s15
    $region7: #{tpu_custom_call.1} parent=1 // loop_footer_branch
      %14 = sbr.rel target = $region3
    $region8: #{tpu_custom_call.1} parent=1 // loop_exit
      _
    %577 = vsyncpa [#allocation3], 1
    %s578 = scalar_lea.sflag [#allocation3], 1
    %579 = vsyncpa %s578, 1
    %580 = vsyncpa [#allocation6], 1
    %s581 = scalar_lea.sflag [#allocation6], 1
    %582 = vsyncpa %s581, 1
    %583 = vsyncpa [#allocation4], 1
    %s584 = scalar_lea.sflag [#allocation4], 1
    %585 = vsyncpa %s584, 1

</llo_original>
